<compile_context>
chip_gen: v6e
topology: v6e:2x2x1
jax: 0.10.0
libtpu: 0.0.40
codegen_flags: <defaults>
</compile_context>

<pallas_src>
import jax
import jax.numpy as jnp
from jax.experimental import pallas as pl
from jax.experimental.pallas import tpu as pltpu


def _vq_kernel(z_ref, mu_ref, mu_t_ref, half_mu_sq_ref, zq_ref, counts_ref):
    """One (bN, C, T) tile: distances -> argmin -> one-hot -> quantize -> counts.

    z_ref:          (bN, C, T)  activation tile (native dtype), spatial on lanes
    mu_ref:         (bN, K, C)  bf16 codebook (mu half), broadcast over bN, resident
    mu_t_ref:       (bN, C, K)  f32 codebook transpose, resident
    half_mu_sq_ref: (1, K, 1)   f32 0.5*||mu_bf16||^2, resident
    zq_ref:         (bN, C, T)  quantized output tile (lane-dense store)
    counts_ref:     (K, 1)      per-batch-block code counts, accumulated over hw axis
    """
    i = pl.program_id(1)

    @pl.when(i == 0)
    def _():
        counts_ref[...] = jnp.zeros_like(counts_ref)

    z_bf = z_ref[...].astype(jnp.bfloat16)            # (bN, C, T)
    mu_bf = mu_ref[...]                               # (bN, K, C) bf16

    # cross[b, k, t] = <mu_k, z_{b,:,t}>  -- bf16 operands, f32 MXU accumulation.
    cross = jax.lax.dot_general(
        mu_bf, z_bf,
        dimension_numbers=(((2,), (1,)), ((0,), (0,))),
        preferred_element_type=jnp.float32)           # (bN, K, T) f32

    # Squared distance up to a per-column constant: 0.5*||mu||^2 - <mu, z>.
    d = half_mu_sq_ref[...] - cross                   # (bN, K, T) f32
    K = d.shape[1]

    # First-occurrence argmin over codes (sublane axis), matching torch.argmin.
    # (If z contains NaN, the column quantizes to 0 -- same behavior as before.)
    min_d = jnp.min(d, axis=1, keepdims=True)                       # (bN, 1, T)
    iota_k = jax.lax.broadcasted_iota(jnp.int32, d.shape, 1)        # (bN, K, T)
    idx = jnp.min(jnp.where(d == min_d, iota_k, K), axis=1, keepdims=True)
    onehot = (iota_k == idx).astype(jnp.float32)                    # (bN, K, T)

    # z_q tile = mu^T @ onehot (contract K), f32 so outputs are exact codebook rows.
    zq = jax.lax.dot_general(
        mu_t_ref[...], onehot,
        dimension_numbers=(((2,), (1,)), ((0,), (0,))),
        preferred_element_type=jnp.float32)           # (bN, C, T) f32
    zq_ref[...] = zq.astype(zq_ref.dtype)

    # Per-code counts via XLU lane reduce (the MXU is the binding slot; the XLU
    # is nearly idle).  Accumulated in the resident output block across the hw axis.
    cnt = jnp.sum(jnp.sum(onehot, axis=2, keepdims=True), axis=0)   # (K, 1) f32
    counts_ref[...] += cnt


def _largest_divisor(n, cap, multiple_of=1):
    """Largest d <= cap with n % d == 0, preferring multiples of `multiple_of`."""
    cap = max(1, min(cap, n))
    if multiple_of > 1:
        d = cap - cap % multiple_of
        while d >= multiple_of:
            if n % d == 0:
                return d
            d -= multiple_of
    d = cap
    while d > 1:
        if n % d == 0:
            return d
        d -= 1
    return 1


def ws_vector_quantizer_forward(z, codebook, codebook_weight, flg_train=False,
                                beta=0.25, kl_regularization=0.0,
                                t_hw_target=8192, max_cols_per_step=16384):
    """Forward of WS_VectorQuantizer._quantize.

    z:               (N, C, H, W)  -- NCHW like PyTorch
    codebook:        (K, 2*C)      -- mu = codebook[:, :C]
    codebook_weight: unused on the eval (flg_train=False) path
    Returns (z_q in NCHW, loss, perplexity).
    """
    N, C, H, W = z.shape
    K = codebook.shape[0]
    split = codebook.shape[1] // 2
    mu = codebook[:, :split]                          # (K, C)
    assert mu.shape[1] == C, "dim_dict (codebook half-width) must match channel dim"

    HW = H * W

    # Spatial tile: biggest divisor of HW <= target, preferring multiples of 128
    # (lane-dense blocks).  Fallback: the whole row (block == full dim is legal).
    t_hw = _largest_divisor(HW, t_hw_target, multiple_of=128)
    if t_hw % 128 != 0:
        t_hw = HW
    # Batch blocking: several samples per grid step when HW is small, so each
    # step does enough work to amortize the per-step grid overhead.
    bN = _largest_divisor(N, max(1, max_cols_per_step // t_hw))
    grid_n, grid_hw = N // bN, HW // t_hw
    grid = (grid_n, grid_hw)

    # Pure reshape (no transpose): row order is irrelevant for VQ.
    z_flat = z.reshape(N, C, HW)                      # (N, C, HW)

    # Tiny resident inputs: bf16 mu for the distance matmul, f32 mu^T for exact
    # quantized rows, and 0.5*||mu||^2 computed from the SAME bf16-rounded mu
    # (keeps both distance terms consistent).
    mu_bf16 = mu.astype(jnp.bfloat16)
    mu_bc = jnp.broadcast_to(mu_bf16[None], (bN, K, C))                    # bf16
    mu_t_bc = jnp.broadcast_to(mu.astype(jnp.float32).T[None], (bN, C, K))  # f32
    half_mu_sq = (0.5 * jnp.sum(mu_bf16.astype(jnp.float32) ** 2, axis=1)
                  ).reshape(1, K, 1)

    # VMEM estimate: double-buffered z/z_q tiles + a few f32 (bN,K,t_hw) temps.
    tile_cols = bN * t_hw
    est = (2 * 2 * C * tile_cols * z.dtype.itemsize
           + 6 * K * tile_cols * 4
           + 2 * bN * K * C * 8 + K * 8)
    vmem_limit = int(min(max(2 * est, 32 * 1024 * 1024), 48 * 1024 * 1024))

    M = N * HW
    cost = pl.CostEstimate(
        flops=int(4 * K * C * M),                     # cross + selection matmuls
        transcendentals=0,
        bytes_accessed=int(2 * N * C * HW * z.dtype.itemsize + grid_n * K * 4))

    zq_flat, counts = pl.pallas_call(
        _vq_kernel,
        out_shape=(jax.ShapeDtypeStruct((N, C, HW), z.dtype),
                   jax.ShapeDtypeStruct((grid_n, K, 1), jnp.float32)),
        grid_spec=pltpu.PrefetchScalarGridSpec(
            num_scalar_prefetch=0,
            grid=grid,
            in_specs=[
                pl.BlockSpec((bN, C, t_hw), lambda nb, i: (nb, 0, i)),   # z tile
                pl.BlockSpec((bN, K, C), lambda nb, i: (0, 0, 0)),       # mu (bf16)
                pl.BlockSpec((bN, C, K), lambda nb, i: (0, 0, 0)),       # mu^T (f32)
                pl.BlockSpec((1, K, 1), lambda nb, i: (0, 0, 0)),        # 0.5*||mu||^2
            ],
            out_specs=(
                pl.BlockSpec((bN, C, t_hw), lambda nb, i: (nb, 0, i)),   # z_q tile
                pl.BlockSpec((None, K, 1), lambda nb, i: (nb, 0, 0)),    # counts acc
            ),
        ),
        compiler_params=pltpu.CompilerParams(
            dimension_semantics=("parallel", "arbitrary"),
            vmem_limit_bytes=vmem_limit),
        cost_estimate=cost,
    )(z_flat, mu_bc, mu_t_bc, half_mu_sq)

    z_q = zq_flat.reshape(N, C, H, W)

    # Straight-through estimator (matches z + (z_q - z).detach() in PyTorch).
    z_q = z + jax.lax.stop_gradient(z_q - z)

    # Perplexity from the per-batch-block accumulated counts.
    e_mean = jnp.sum(counts, axis=(0, 2)) / M
    perplexity = jnp.exp(-jnp.sum(e_mean * jnp.log(e_mean + 1e-10)))

    if flg_train:
        # TODO(synk): training loss uses ot.emd2 (exact EMD linear program per
        # spatial location) plus nn.KLDivLoss regularization; no clean
        # Pallas/TPU equivalent, so it is not implemented here.
        loss = jnp.float32(0.0)
    else:
        loss = jnp.float32(0.0)

    return z_q, loss, perplexity


if __name__ == "__main__":
    # Small shapes consistent with the module: N=2, C(dim_dict)=4, H=W=16, K(size_dict)=16
    N, C, H, W = 2, 4, 16, 16
    K = 16

    key = jax.random.PRNGKey(0)
    kz, kc, kw = jax.random.split(key, 3)
    z = jax.random.normal(kz, (N, C, H, W), dtype=jnp.float32)
    codebook = jax.random.normal(kc, (K, 2 * C), dtype=jnp.float32)
    codebook_weight = jax.random.normal(kw, (H * W, K), dtype=jnp.float32)

    z_q, loss, perplexity = ws_vector_quantizer_forward(
        z, codebook, codebook_weight, flg_train=False)
    jax.block_until_ready((z_q, loss, perplexity))

    # --- reference check: same bf16-rounded distance math the kernel uses,
    #     but computed with plain XLA ops (row order irrelevant for VQ). ---
    mu_f32 = codebook[:, :C]                                        # (K, C)
    mu_bf = mu_f32.astype(jnp.bfloat16).astype(jnp.float32)
    zf = jnp.transpose(z, (0, 2, 3, 1)).reshape(-1, C)              # (N*H*W, C)
    zf_bf = zf.astype(jnp.bfloat16).astype(jnp.float32)
    d_ref = 0.5 * jnp.sum(mu_bf ** 2, axis=1)[None, :] - zf_bf @ mu_bf.T
    idx_ref = jnp.argmin(d_ref, axis=1)
    zq_expected = mu_f32[idx_ref].reshape(N, H, W, C).transpose(0, 3, 1, 2)

    assert z_q.shape == z.shape
    # Allow a couple of positions to differ: exact ties may resolve differently
    # under MXU accumulation order vs. the XLA reference.
    per_pos_bad = jnp.any(jnp.abs(z_q - zq_expected) > 1e-4, axis=1)
    n_bad = int(jnp.sum(per_pos_bad))
    assert n_bad <= 2, f"{n_bad} quantized positions mismatch the reference"

    onehot_ref = jax.nn.one_hot(idx_ref, K, dtype=jnp.float32)
    e_mean_ref = jnp.mean(onehot_ref, axis=0)
    perp_ref = jnp.exp(-jnp.sum(e_mean_ref * jnp.log(e_mean_ref + 1e-10)))
    assert jnp.isfinite(perplexity)
    assert abs(float(perplexity) - float(perp_ref)) < 0.05, (perplexity, perp_ref)
    assert float(loss) == 0.0

    print("KERNEL_OK")
</pallas_src>

<mosaic_0001>
module attributes {stable_mosaic.version = 11 : i64} {
  func.func @_vq_kernel(%arg0: i32, %arg1: i32, %arg2: memref<2x4x256xf32, #tpu.memory_space<vmem>>, %arg3: memref<2x16x4xbf16, #tpu.memory_space<vmem>>, %arg4: memref<2x4x16xf32, #tpu.memory_space<vmem>>, %arg5: memref<1x16x1xf32, #tpu.memory_space<vmem>>, %arg6: memref<2x4x256xf32, #tpu.memory_space<vmem>>, %arg7: memref<1x16x1xf32, #tpu.memory_space<vmem>>) attributes {dimension_semantics = [#tpu.dimension_semantics<parallel>, #tpu.dimension_semantics<arbitrary>], iteration_bounds = array<i64: 1, 1>, scalar_prefetch = 0 : i64, scratch_operands = 0 : i64, tpu.core_type = #tpu.core_type<tc>, window_params = [{transform_indices = @transform_0, window_bounds = array<i64: 2, 4, 256>}, {pipeline_mode = #tpu.pipeline_mode<synchronous>, transform_indices = @transform_1, window_bounds = array<i64: 2, 16, 4>}, {pipeline_mode = #tpu.pipeline_mode<synchronous>, transform_indices = @transform_2, window_bounds = array<i64: 2, 4, 16>}, {pipeline_mode = #tpu.pipeline_mode<synchronous>, transform_indices = @transform_3, window_bounds = array<i64: 1, 16, 1>}, {transform_indices = @transform_4, window_bounds = array<i64: 2, 4, 256>}, {transform_indices = @transform_5, window_bounds = array<i64: 1, 16, 1>}]} {
    %c0_i32 = arith.constant 0 : i32
    %0 = arith.cmpi eq, %arg1, %c0_i32 : i32
    %1 = arith.extui %0 : i1 to i32
    %c0_i32_0 = arith.constant 0 : i32
    %2 = arith.cmpi ne, %1, %c0_i32_0 : i32
    scf.if %2 {
      %cst_26 = arith.constant 0.000000e+00 : f32
      %35 = vector.broadcast %cst_26 : f32 to vector<16x1xf32>
      %c0_27 = arith.constant 0 : index
      %c0_28 = arith.constant 0 : index
      %c0_29 = arith.constant 0 : index
      %36 = vector.load %arg7[%c0_27, %c0_28, %c0_29] : memref<1x16x1xf32, #tpu.memory_space<vmem>>, vector<1x16x1xf32>
      %37 = vector.shape_cast %36 : vector<1x16x1xf32> to vector<16x1xf32>
      %38 = vector.shape_cast %35 : vector<16x1xf32> to vector<1x16x1xf32>
      tpu.vector_store %arg7[%c0_27, %c0_28, %c0_29], %38 {strides = array<i32>} : memref<1x16x1xf32, #tpu.memory_space<vmem>>, vector<1x16x1xf32>,
    } else {
    }
    %c0 = arith.constant 0 : index
    %c0_1 = arith.constant 0 : index
    %c0_2 = arith.constant 0 : index
    %3 = vector.load %arg2[%c0, %c0_1, %c0_2] : memref<2x4x256xf32, #tpu.memory_space<vmem>>, vector<2x4x256xf32>
    %4 = arith.truncf %3 : vector<2x4x256xf32> to vector<2x4x256xbf16>
    %c0_3 = arith.constant 0 : index
    %c0_4 = arith.constant 0 : index
    %c0_5 = arith.constant 0 : index
    %5 = vector.load %arg3[%c0_3, %c0_4, %c0_5] : memref<2x16x4xbf16, #tpu.memory_space<vmem>>, vector<2x16x4xbf16>
    %cst = arith.constant dense<0.000000e+00> : vector<2x16x256xf32>
    %6 = tpu.matmul %5, %4, %cst {dimension_numbers = #tpu.dot_dimension_numbers<[2], [1], [1], [2], [0, 0, 0, 1, 1, 2], [0], [0]>} : vector<2x16x4xbf16>, vector<2x4x256xbf16>, vector<2x16x256xf32> -> vector<2x16x256xf32>
    %c0_6 = arith.constant 0 : index
    %c0_7 = arith.constant 0 : index
    %c0_8 = arith.constant 0 : index
    %7 = vector.load %arg5[%c0_6, %c0_7, %c0_8] : memref<1x16x1xf32, #tpu.memory_space<vmem>>, vector<1x16x1xf32>
    %8 = vector.broadcast %7 : vector<1x16x1xf32> to vector<2x16x256xf32>
    %9 = arith.subf %8, %6 : vector<2x16x256xf32>
    %cst_9 = arith.constant dense<0x7F800000> : vector<2x256xf32>
    %10 = vector.multi_reduction <minimumf>, %9, %cst_9 [1] : vector<2x16x256xf32> to vector<2x256xf32>
    %11 = vector.shape_cast %10 : vector<2x256xf32> to vector<2x1x256xf32>
    %12 = tpu.iota {dimensions = array<i32: 1>} : vector<2x16x256xi32>
    %13 = vector.broadcast %11 : vector<2x1x256xf32> to vector<2x16x256xf32>
    %14 = arith.cmpf oeq, %9, %13 : vector<2x16x256xf32>
    %c16_i32 = arith.constant 16 : i32
    %15 = vector.broadcast %c16_i32 : i32 to vector<2x16x256xi32>
    %16 = arith.select %14, %12, %15 : vector<2x16x256xi1>, vector<2x16x256xi32>
    %cst_10 = arith.constant dense<2147483647> : vector<2x256xi32>
    %17 = vector.multi_reduction <minsi>, %16, %cst_10 [1] : vector<2x16x256xi32> to vector<2x256xi32>
    %18 = vector.shape_cast %17 : vector<2x256xi32> to vector<2x1x256xi32>
    %19 = vector.broadcast %18 : vector<2x1x256xi32> to vector<2x16x256xi32>
    %20 = arith.cmpi eq, %12, %19 : vector<2x16x256xi32>
    %21 = arith.extui %20 : vector<2x16x256xi1> to vector<2x16x256xi32>
    %22 = arith.sitofp %21 : vector<2x16x256xi32> to vector<2x16x256xf32>
    %c0_11 = arith.constant 0 : index
    %c0_12 = arith.constant 0 : index
    %c0_13 = arith.constant 0 : index
    %23 = vector.load %arg4[%c0_11, %c0_12, %c0_13] : memref<2x4x16xf32, #tpu.memory_space<vmem>>, vector<2x4x16xf32>
    %cst_14 = arith.constant dense<0.000000e+00> : vector<2x4x256xf32>
    %24 = tpu.matmul %23, %22, %cst_14 {dimension_numbers = #tpu.dot_dimension_numbers<[2], [1], [1], [2], [0, 0, 0, 1, 1, 2], [0], [0]>} : vector<2x4x16xf32>, vector<2x16x256xf32>, vector<2x4x256xf32> -> vector<2x4x256xf32>
    %c0_15 = arith.constant 0 : index
    %c0_16 = arith.constant 0 : index
    %c0_17 = arith.constant 0 : index
    %25 = vector.load %arg6[%c0_15, %c0_16, %c0_17] : memref<2x4x256xf32, #tpu.memory_space<vmem>>, vector<2x4x256xf32>
    tpu.vector_store %arg6[%c0_15, %c0_16, %c0_17], %24 {strides = array<i32>} : memref<2x4x256xf32, #tpu.memory_space<vmem>>, vector<2x4x256xf32>,
    %cst_18 = arith.constant dense<0.000000e+00> : vector<2x16xf32>
    %26 = vector.multi_reduction <add>, %22, %cst_18 [2] : vector<2x16x256xf32> to vector<2x16xf32>
    %27 = vector.shape_cast %26 : vector<2x16xf32> to vector<2x16x1xf32>
    %cst_19 = arith.constant dense<0.000000e+00> : vector<16x1xf32>
    %28 = vector.multi_reduction <add>, %27, %cst_19 [0] : vector<2x16x1xf32> to vector<16x1xf32>
    %c0_20 = arith.constant 0 : index
    %c0_21 = arith.constant 0 : index
    %c0_22 = arith.constant 0 : index
    %29 = vector.load %arg7[%c0_20, %c0_21, %c0_22] : memref<1x16x1xf32, #tpu.memory_space<vmem>>, vector<1x16x1xf32>
    %30 = vector.shape_cast %29 : vector<1x16x1xf32> to vector<16x1xf32>
    %31 = arith.addf %30, %28 : vector<16x1xf32>
    %c0_23 = arith.constant 0 : index
    %c0_24 = arith.constant 0 : index
    %c0_25 = arith.constant 0 : index
    %32 = vector.load %arg7[%c0_23, %c0_24, %c0_25] : memref<1x16x1xf32, #tpu.memory_space<vmem>>, vector<1x16x1xf32>
    %33 = vector.shape_cast %32 : vector<1x16x1xf32> to vector<16x1xf32>
    %34 = vector.shape_cast %31 : vector<16x1xf32> to vector<1x16x1xf32>
    tpu.vector_store %arg7[%c0_23, %c0_24, %c0_25], %34 {strides = array<i32>} : memref<1x16x1xf32, #tpu.memory_space<vmem>>, vector<1x16x1xf32>,
    return
  }
  func.func @transform_0(%arg0: i32, %arg1: i32) -> (i32, i32, i32) {
    %c0_i32 = arith.constant 0 : i32
    %c0_i32_0 = arith.constant 0 : i32
    return %arg0, %c0_i32, %arg1 : i32, i32, i32
  }
  func.func @transform_1(%arg0: i32, %arg1: i32) -> (i32, i32, i32) {
    %c0_i32 = arith.constant 0 : i32
    %c0_i32_0 = arith.constant 0 : i32
    %c0_i32_1 = arith.constant 0 : i32
    %c0_i32_2 = arith.constant 0 : i32
    return %c0_i32, %c0_i32_0, %c0_i32_1 : i32, i32, i32
  }
  func.func @transform_2(%arg0: i32, %arg1: i32) -> (i32, i32, i32) {
    %c0_i32 = arith.constant 0 : i32
    %c0_i32_0 = arith.constant 0 : i32
    %c0_i32_1 = arith.constant 0 : i32
    %c0_i32_2 = arith.constant 0 : i32
    return %c0_i32, %c0_i32_0, %c0_i32_1 : i32, i32, i32
  }
  func.func @transform_3(%arg0: i32, %arg1: i32) -> (i32, i32, i32) {
    %c0_i32 = arith.constant 0 : i32
    %c0_i32_0 = arith.constant 0 : i32
    %c0_i32_1 = arith.constant 0 : i32
    %c0_i32_2 = arith.constant 0 : i32
    return %c0_i32, %c0_i32_0, %c0_i32_1 : i32, i32, i32
  }
  func.func @transform_4(%arg0: i32, %arg1: i32) -> (i32, i32, i32) {
    %c0_i32 = arith.constant 0 : i32
    %c0_i32_0 = arith.constant 0 : i32
    return %arg0, %c0_i32, %arg1 : i32, i32, i32
  }
  func.func @transform_5(%arg0: i32, %arg1: i32) -> (i32, i32, i32) {
    %c0_i32 = arith.constant 0 : i32
    %c0_i32_0 = arith.constant 0 : i32
    %c0_i32_1 = arith.constant 0 : i32
    return %arg0, %c0_i32, %c0_i32_0 : i32, i32, i32
  }
}

</mosaic_0001>

<llo_original>
// kernel: tpu_custom_call.1
$region0: #{tpu_custom_call.1}
  #allocation0 [shape = 'u32[]', space=smem, size = 0x4, offset = 0x4, fixed_abs, tag = 'smem constant byte address 0x4 - core index']
  #allocation1 [shape = 'u32[144,128]{1,0:T(1,128)}', space=vmem, size = 0x12000, scoped, tag = 'internal scratch']
  %s0 = inlined_call_operand.vmem [shape: f32[2,4,256], index: 0, kind: input, shape index: {}]
  %s1 = inlined_call_operand.vmem [shape: bf16[2,16,4], index: 1, kind: input, shape index: {}]
  %s2 = inlined_call_operand.vmem [shape: f32[2,4,16], index: 2, kind: input, shape index: {}]
  %s3 = inlined_call_operand.vmem [shape: f32[1,16,1], index: 3, kind: input, shape index: {}]
  %s4 = inlined_call_operand.hbm [shape: f32[2,4,256], index: 4, kind: output, shape index: {0}]
  %s5 = inlined_call_operand.vmem [shape: f32[1,16,1], index: 5, kind: output, shape index: {1}]
  %6 = xla_tuple %s4, %s5
  %s7 = sld [smem:[#allocation0]]
  $region38: #{tpu_custom_call.1} parent=0
    _
  %s9 = ssub.s32 1, %s7
  %s10 = scalar_select 0, %s9, %s7
  $region1: #{tpu_custom_call.1} parent=0
    #allocation2 [shape = 'u8[8192]{0}', space=vmem, size = 0x2000, scoped, tag = 'output window, operand 0, single buffered']
    #allocation3 [shape = 's32[1]{0}', space=sflag, size = 0x4, scoped, tag = 'scoped memory for tpu_custom_call.1']
    %11 = vsyncpa [#allocation3], 0
    // Predicated region
    $region2: #{tpu_custom_call.1} parent=1 // pred_check
      _
    $region3: #{tpu_custom_call.1} parent=1 // pred_check_branch
      %13 = sbr.rel (0) target = $region5
    $region4: #{tpu_custom_call.1} parent=1 // pred_region
      _
    $region5: #{tpu_custom_call.1} parent=1 // pred_fallthru
      _
    // Predicated region
    $region6: #{tpu_custom_call.1} parent=1 // pred_check
      _
    $region7: #{tpu_custom_call.1} parent=1 // pred_check_branch
      %15 = sbr.rel (0) target = $region9
    $region8: #{tpu_custom_call.1} parent=1 // pred_region
      _
    $region9: #{tpu_custom_call.1} parent=1 // pred_fallthru
      _
    // Predicated region
    $region10: #{tpu_custom_call.1} parent=1 // pred_check
      _
    $region11: #{tpu_custom_call.1} parent=1 // pred_check_branch
      %17 = sbr.rel (0) target = $region13
    $region12: #{tpu_custom_call.1} parent=1 // pred_region
      _
    $region13: #{tpu_custom_call.1} parent=1 // pred_fallthru
      _
    // Predicated region
    $region14: #{tpu_custom_call.1} parent=1 // pred_check
      _
    $region15: #{tpu_custom_call.1} parent=1 // pred_check_branch
      %19 = sbr.rel (0) target = $region17
    $region16: #{tpu_custom_call.1} parent=1 // pred_region
      _
    $region17: #{tpu_custom_call.1} parent=1 // pred_fallthru
      _
    %p21 = scmp.eq.s32.totalorder 0, 0
    // Predicated region
    $region18: #{tpu_custom_call.1} parent=1 // pred_check
      %p22 = pneg %p21
    $region19: #{tpu_custom_call.1} parent=1 // pred_check_branch
      %24 = sbr.rel (%p22) target = $region21
    $region20: #{tpu_custom_call.1} parent=1 // pred_region
      %vm25 = vcmask 7168
      %26 = vst.msk [vmem:[%s5] sm:$0xff] %vm25, 0.0
      %27 = vst.msk [vmem:[%s5 + $0x8] sm:$0xff] %vm25, 0.0
    $region21: #{tpu_custom_call.1} parent=1 // pred_fallthru
      _
    %v28 = vld [vmem:[%s0] sm:$0xff]
    %v29 = vld [vmem:[%s0 + $0x8] sm:$0xff]
    %v32 = vcombine.high %v28, %v28
    %v33 = vcombine.high %v29, %v29
    %v36 = vpack.c.bf16 %v28, %v28
    %v37 = vpack.c.bf16 %v32, %v32
    %v38 = vpack.c.bf16 %v29, %v29
    %v39 = vpack.c.bf16 %v33, %v33
    %v40 = vld [vmem:[%s1] sm:$0xf]
    %v41 = vld [vmem:[%s1 + $0x4] sm:$0xf]
    %v42 = vld [vmem:[%s1 + $0x8] sm:$0xf]
    %v43 = vld [vmem:[%s1 + $0xc] sm:$0xf]
    %v46 = vunpack.c.l.b16 %v40
    %v47 = vunpack.c.l.b16 %v41
    %v48 = vpack.c.b16 %v47, %v46
    %vm49 = vcmask 31744
    %v51 = vsel %vm49, %v48, 0
    %vm53 = vcmask 1041408
    %v55 = vsel %vm53, %v36, 0
    %v58 = vsel %vm53, %v37, 0
    %60 = vmatprep.subr.bf16.mxu0 0
    %61 = vmatpush1.bf16.msra.mxu0 0
    %62 = vmatprep.subr.bf16.mxu0 0
    %63 = vmatpush1.bf16.msra.mxu0 0
    %64 = vmatprep.subr.bf16.mxu0 0
    %65 = vmatpush1.bf16.msra.mxu0 0
    %66 = vmatprep.subr.bf16.mxu0 0
    %67 = vmatpush1.bf16.msra.mxu0 0
    %68 = vmatprep.subr.bf16.mxu0 0
    %69 = vmatpush1.bf16.msra.mxu0 0
    %70 = vmatprep.subr.bf16.mxu0 0
    %71 = vmatpush1.bf16.msra.mxu0 0
    %72 = vmatprep.subr.bf16.mxu0 0
    %73 = vmatpush1.bf16.msra.mxu0 0
    %74 = vmatprep.subr.bf16.mxu0 %v58
    %75 = vmatpush1.bf16.msra.mxu0 %v55
    %76 = vmatprep.subr.bf16.mxu0 0
    %77 = vmatpush2.bf16.msra.mxu0 0
    %78 = vmatprep.subr.bf16.mxu0 0
    %79 = vmatpush2.bf16.msra.mxu0 0
    %80 = vmatprep.subr.bf16.mxu0 0
    %81 = vmatpush2.bf16.msra.mxu0 0
    %82 = vmatprep.subr.bf16.mxu0 0
    %83 = vmatpush2.bf16.msra.mxu0 0
    %84 = vmatprep.subr.bf16.mxu0 0
    %85 = vmatpush2.bf16.msra.mxu0 0
    %86 = vmatprep.subr.bf16.mxu0 0
    %87 = vmatpush2.bf16.msra.mxu0 0
    %88 = vmatprep.subr.bf16.mxu0 0
    %89 = vmatpush2.bf16.msra.mxu0 0
    %90 = vmatprep.subr.bf16.mxu0 0
    %91 = vmatpush2.bf16.msra.mxu0 0
    %92 = vmatprep.mubr.bf16.mxu0 0
    %93 = vmatmul.mubr.bf16.gmra.mxu0 %v51
    %v94 = vpop.f32.mrf.mxu0
    %v95 = vadd.f32 0.0, %v94
    %v96 = vpop.f32.mrf.mxu0
    %v97 = vadd.f32 0.0, %v96
    %v98 = vpop.f32.mrf.mxu0
    %v99 = vadd.f32 0.0, %v98
    %v100 = vpop.f32.mrf.mxu0
    %v101 = vadd.f32 0.0, %v100
    %102 = vdwg.mxu0
    %v105 = vunpack.c.l.b16 %v42
    %v106 = vunpack.c.l.b16 %v43
    %v107 = vpack.c.b16 %v106, %v105
    %v109 = vsel %vm49, %v107, 0
    %v112 = vsel %vm53, %v38, 0
    %v115 = vsel %vm53, %v39, 0
    %117 = vmatprep.subr.bf16.mxu0 0
    %118 = vmatpush1.bf16.msra.mxu0 0
    %119 = vmatprep.subr.bf16.mxu0 0
    %120 = vmatpush1.bf16.msra.mxu0 0
    %121 = vmatprep.subr.bf16.mxu0 0
    %122 = vmatpush1.bf16.msra.mxu0 0
    %123 = vmatprep.subr.bf16.mxu0 0
    %124 = vmatpush1.bf16.msra.mxu0 0
    %125 = vmatprep.subr.bf16.mxu0 0
    %126 = vmatpush1.bf16.msra.mxu0 0
    %127 = vmatprep.subr.bf16.mxu0 0
    %128 = vmatpush1.bf16.msra.mxu0 0
    %129 = vmatprep.subr.bf16.mxu0 0
    %130 = vmatpush1.bf16.msra.mxu0 0
    %131 = vmatprep.subr.bf16.mxu0 %v115
    %132 = vmatpush1.bf16.msra.mxu0 %v112
    %133 = vmatprep.subr.bf16.mxu0 0
    %134 = vmatpush2.bf16.msra.mxu0 0
    %135 = vmatprep.subr.bf16.mxu0 0
    %136 = vmatpush2.bf16.msra.mxu0 0
    %137 = vmatprep.subr.bf16.mxu0 0
    %138 = vmatpush2.bf16.msra.mxu0 0
    %139 = vmatprep.subr.bf16.mxu0 0
    %140 = vmatpush2.bf16.msra.mxu0 0
    %141 = vmatprep.subr.bf16.mxu0 0
    %142 = vmatpush2.bf16.msra.mxu0 0
    %143 = vmatprep.subr.bf16.mxu0 0
    %144 = vmatpush2.bf16.msra.mxu0 0
    %145 = vmatprep.subr.bf16.mxu0 0
    %146 = vmatpush2.bf16.msra.mxu0 0
    %147 = vmatprep.subr.bf16.mxu0 0
    %148 = vmatpush2.bf16.msra.mxu0 0
    %149 = vmatprep.mubr.bf16.mxu0 0
    %150 = vmatmul.mubr.bf16.gmra.mxu0 %v109
    %v151 = vpop.f32.mrf.mxu0
    %v152 = vadd.f32 0.0, %v151
    %v153 = vpop.f32.mrf.mxu0
    %v154 = vadd.f32 0.0, %v153
    %v155 = vpop.f32.mrf.mxu0
    %v156 = vadd.f32 0.0, %v155
    %v157 = vpop.f32.mrf.mxu0
    %v158 = vadd.f32 0.0, %v157
    %159 = vdwg.mxu0
    %v160 = vld [vmem:[%s3] sm:$0xff]
    %v161 = vld [vmem:[%s3 + $0x8] sm:$0xff]
    %163 = vset.pattern.permute.xlu0 0
    %164 = vperm.xlu0 %163, %v160
    %v165 = vpop.permute.xlu0 %164
    %168 = vset.pattern.permute.xlu0 0
    %169 = vperm.xlu0 %168, %v161
    %v170 = vpop.permute.xlu0 %169
    %v172 = vsub.f32 %v165, %v95
    %v173 = vsub.f32 %v165, %v97
    %v174 = vsub.f32 %v170, %v99
    %v175 = vsub.f32 %v170, %v101
    %v176 = vsub.f32 %v165, %v152
    %v177 = vsub.f32 %v165, %v154
    %v178 = vsub.f32 %v170, %v156
    %v179 = vsub.f32 %v170, %v158
    %v180 = vmin.f32 %v172, %v174
    %v181 = vrot.slane %v180, 4
    %v182 = vmin.f32 %v180, %v181
    %v183 = vrot.slane %v182, 2
    %v184 = vmin.f32 %v182, %v183
    %v185 = vrot.slane %v184, 1
    %v186 = vmin.f32 %v184, %v185
    %v187 = vmin.f32 %v173, %v175
    %v188 = vrot.slane %v187, 4
    %v189 = vmin.f32 %v187, %v188
    %v190 = vrot.slane %v189, 2
    %v191 = vmin.f32 %v189, %v190
    %v192 = vrot.slane %v191, 1
    %v193 = vmin.f32 %v191, %v192
    %v194 = vmin.f32 %v176, %v178
    %v195 = vrot.slane %v194, 4
    %v196 = vmin.f32 %v194, %v195
    %v197 = vrot.slane %v196, 2
    %v198 = vmin.f32 %v196, %v197
    %v199 = vrot.slane %v198, 1
    %v200 = vmin.f32 %v198, %v199
    %v201 = vmin.f32 %v177, %v179
    %v202 = vrot.slane %v201, 4
    %v203 = vmin.f32 %v201, %v202
    %v204 = vrot.slane %v203, 2
    %v205 = vmin.f32 %v203, %v204
    %v206 = vrot.slane %v205, 1
    %v207 = vmin.f32 %v205, %v206
    %v208 = vlaneseq
    %v209 = vshrl.u32 %v208, 7
    %v210 = vadd.s32 %v209, 8
    %vm211 = vcmp.eq.f32.partialorder %v172, %v186
    %vm212 = vcmp.eq.f32.partialorder %v173, %v193
    %vm213 = vcmp.eq.f32.partialorder %v174, %v186
    %vm214 = vcmp.eq.f32.partialorder %v175, %v193
    %vm215 = vcmp.eq.f32.partialorder %v176, %v200
    %vm216 = vcmp.eq.f32.partialorder %v177, %v207
    %vm217 = vcmp.eq.f32.partialorder %v178, %v200
    %vm218 = vcmp.eq.f32.partialorder %v179, %v207
    %v219 = vsel %vm211, %v209, 16
    %v220 = vsel %vm212, %v209, 16
    %v221 = vsel %vm213, %v210, 16
    %v222 = vsel %vm214, %v210, 16
    %v223 = vsel %vm215, %v209, 16
    %v224 = vsel %vm216, %v209, 16
    %v225 = vsel %vm217, %v210, 16
    %v226 = vsel %vm218, %v210, 16
    %vm227 = vcmp.lt.s32.totalorder %v219, %v221
    %v228 = vsel %vm227, %v219, %v221
    %v229 = vrot.slane %v228, 4
    %vm230 = vcmp.lt.s32.totalorder %v228, %v229
    %v231 = vsel %vm230, %v228, %v229
    %v232 = vrot.slane %v231, 2
    %vm233 = vcmp.lt.s32.totalorder %v231, %v232
    %v234 = vsel %vm233, %v231, %v232
    %v235 = vrot.slane %v234, 1
    %vm236 = vcmp.lt.s32.totalorder %v234, %v235
    %v237 = vsel %vm236, %v234, %v235
    %vm238 = vcmp.lt.s32.totalorder %v220, %v222
    %v239 = vsel %vm238, %v220, %v222
    %v240 = vrot.slane %v239, 4
    %vm241 = vcmp.lt.s32.totalorder %v239, %v240
    %v242 = vsel %vm241, %v239, %v240
    %v243 = vrot.slane %v242, 2
    %vm244 = vcmp.lt.s32.totalorder %v242, %v243
    %v245 = vsel %vm244, %v242, %v243
    %v246 = vrot.slane %v245, 1
    %vm247 = vcmp.lt.s32.totalorder %v245, %v246
    %v248 = vsel %vm247, %v245, %v246
    %vm249 = vcmp.lt.s32.totalorder %v223, %v225
    %v250 = vsel %vm249, %v223, %v225
    %v251 = vrot.slane %v250, 4
    %vm252 = vcmp.lt.s32.totalorder %v250, %v251
    %v253 = vsel %vm252, %v250, %v251
    %v254 = vrot.slane %v253, 2
    %vm255 = vcmp.lt.s32.totalorder %v253, %v254
    %v256 = vsel %vm255, %v253, %v254
    %v257 = vrot.slane %v256, 1
    %vm258 = vcmp.lt.s32.totalorder %v256, %v257
    %v259 = vsel %vm258, %v256, %v257
    %vm260 = vcmp.lt.s32.totalorder %v224, %v226
    %v261 = vsel %vm260, %v224, %v226
    %v262 = vrot.slane %v261, 4
    %vm263 = vcmp.lt.s32.totalorder %v261, %v262
    %v264 = vsel %vm263, %v261, %v262
    %v265 = vrot.slane %v264, 2
    %vm266 = vcmp.lt.s32.totalorder %v264, %v265
    %v267 = vsel %vm266, %v264, %v265
    %v268 = vrot.slane %v267, 1
    %vm269 = vcmp.lt.s32.totalorder %v267, %v268
    %v270 = vsel %vm269, %v267, %v268
    %vm271 = vcmp.eq.s32.totalorder %v209, %v237
    %vm272 = vcmp.eq.s32.totalorder %v209, %v248
    %vm273 = vcmp.eq.s32.totalorder %v210, %v237
    %vm274 = vcmp.eq.s32.totalorder %v210, %v248
    %vm275 = vcmp.eq.s32.totalorder %v209, %v259
    %vm276 = vcmp.eq.s32.totalorder %v209, %v270
    %vm277 = vcmp.eq.s32.totalorder %v210, %v259
    %vm278 = vcmp.eq.s32.totalorder %v210, %v270
    %v279 = vsel %vm271, 1, 0
    %v280 = vsel %vm272, 1, 0
    %v281 = vsel %vm273, 1, 0
    %v282 = vsel %vm274, 1, 0
    %v283 = vsel %vm275, 1, 0
    %v284 = vsel %vm276, 1, 0
    %v285 = vsel %vm277, 1, 0
    %v286 = vsel %vm278, 1, 0
    %v287 = vcvt.s32.f32 %v279
    %v288 = vcvt.s32.f32 %v280
    %v289 = vcvt.s32.f32 %v281
    %v290 = vcvt.s32.f32 %v282
    %v291 = vcvt.s32.f32 %v283
    %v292 = vcvt.s32.f32 %v284
    %v293 = vcvt.s32.f32 %v285
    %v294 = vcvt.s32.f32 %v286
    %v295 = vld [vmem:[%s2] sm:$0xf]
    %v296 = vld [vmem:[%s2 + $0x4] sm:$0xf]
    %vm297 = vcmask 130048
    %v299 = vsel %vm297, %v295, 0
    %301 = vmatprep.subr.mxu0 0.0
    %302 = vmatpush1.msra.mxu0 0.0
    %303 = vmatprep.subr.mxu0 0.0
    %304 = vmatpush1.msra.mxu0 0.0
    %305 = vmatprep.subr.mxu0 0.0
    %306 = vmatpush1.msra.mxu0 0.0
    %307 = vmatprep.subr.mxu0 0.0
    %308 = vmatpush1.msra.mxu0 0.0
    %309 = vmatprep.subr.mxu0 0.0
    %310 = vmatpush1.msra.mxu0 0.0
    %311 = vmatprep.subr.mxu0 0.0
    %312 = vmatpush1.msra.mxu0 0.0
    %313 = vmatprep.subr.mxu0 0.0
    %314 = vmatpush1.msra.mxu0 0.0
    %315 = vmatprep.subr.mxu0 0.0
    %316 = vmatpush1.msra.mxu0 0.0
    %317 = vmatprep.subr.mxu0 0.0
    %318 = vmatpush1.msra.mxu0 0.0
    %319 = vmatprep.subr.mxu0 0.0
    %320 = vmatpush1.msra.mxu0 0.0
    %321 = vmatprep.subr.mxu0 0.0
    %322 = vmatpush1.msra.mxu0 0.0
    %323 = vmatprep.subr.mxu0 0.0
    %324 = vmatpush1.msra.mxu0 0.0
    %325 = vmatprep.subr.mxu0 0.0
    %326 = vmatpush1.msra.mxu0 0.0
    %327 = vmatprep.subr.mxu0 0.0
    %328 = vmatpush1.msra.mxu0 0.0
    %329 = vmatprep.subr.mxu0 %v290
    %330 = vmatpush1.msra.mxu0 %v289
    %331 = vmatprep.subr.mxu0 %v288
    %332 = vmatpush1.msra.mxu0 %v287
    %333 = vmatprep.subr.mxu0 0.0
    %334 = vmatpush2.msra.mxu0 0.0
    %335 = vmatprep.subr.mxu0 0.0
    %336 = vmatpush2.msra.mxu0 0.0
    %337 = vmatprep.subr.mxu0 0.0
    %338 = vmatpush2.msra.mxu0 0.0
    %339 = vmatprep.subr.mxu0 0.0
    %340 = vmatpush2.msra.mxu0 0.0
    %341 = vmatprep.subr.mxu0 0.0
    %342 = vmatpush2.msra.mxu0 0.0
    %343 = vmatprep.subr.mxu0 0.0
    %344 = vmatpush2.msra.mxu0 0.0
    %345 = vmatprep.subr.mxu0 0.0
    %346 = vmatpush2.msra.mxu0 0.0
    %347 = vmatprep.subr.mxu0 0.0
    %348 = vmatpush2.msra.mxu0 0.0
    %349 = vmatprep.subr.mxu0 0.0
    %350 = vmatpush2.msra.mxu0 0.0
    %351 = vmatprep.subr.mxu0 0.0
    %352 = vmatpush2.msra.mxu0 0.0
    %353 = vmatprep.subr.mxu0 0.0
    %354 = vmatpush2.msra.mxu0 0.0
    %355 = vmatprep.subr.mxu0 0.0
    %356 = vmatpush2.msra.mxu0 0.0
    %357 = vmatprep.subr.mxu0 0.0
    %358 = vmatpush2.msra.mxu0 0.0
    %359 = vmatprep.subr.mxu0 0.0
    %360 = vmatpush2.msra.mxu0 0.0
    %361 = vmatprep.subr.mxu0 0.0
    %362 = vmatpush2.msra.mxu0 0.0
    %363 = vmatprep.subr.mxu0 0.0
    %364 = vmatpush2.msra.mxu0 0.0
    %365 = vmatprep.mubr.f32.mxu0 0.0
    %366 = vmatmul.mubr.f32.gmra.mxu0 %v299
    %v367 = vpop.f32.mrf.mxu0
    %v368 = vadd.f32 0.0, %v367
    %v369 = vpop.f32.mrf.mxu0
    %v370 = vadd.f32 0.0, %v369
    %371 = vdwg.mxu0
    %v373 = vsel %vm297, %v296, 0
    %375 = vmatprep.subr.mxu0 0.0
    %376 = vmatpush1.msra.mxu0 0.0
    %377 = vmatprep.subr.mxu0 0.0
    %378 = vmatpush1.msra.mxu0 0.0
    %379 = vmatprep.subr.mxu0 0.0
    %380 = vmatpush1.msra.mxu0 0.0
    %381 = vmatprep.subr.mxu0 0.0
    %382 = vmatpush1.msra.mxu0 0.0
    %383 = vmatprep.subr.mxu0 0.0
    %384 = vmatpush1.msra.mxu0 0.0
    %385 = vmatprep.subr.mxu0 0.0
    %386 = vmatpush1.msra.mxu0 0.0
    %387 = vmatprep.subr.mxu0 0.0
    %388 = vmatpush1.msra.mxu0 0.0
    %389 = vmatprep.subr.mxu0 0.0
    %390 = vmatpush1.msra.mxu0 0.0
    %391 = vmatprep.subr.mxu0 0.0
    %392 = vmatpush1.msra.mxu0 0.0
    %393 = vmatprep.subr.mxu0 0.0
    %394 = vmatpush1.msra.mxu0 0.0
    %395 = vmatprep.subr.mxu0 0.0
    %396 = vmatpush1.msra.mxu0 0.0
    %397 = vmatprep.subr.mxu0 0.0
    %398 = vmatpush1.msra.mxu0 0.0
    %399 = vmatprep.subr.mxu0 0.0
    %400 = vmatpush1.msra.mxu0 0.0
    %401 = vmatprep.subr.mxu0 0.0
    %402 = vmatpush1.msra.mxu0 0.0
    %403 = vmatprep.subr.mxu0 %v294
    %404 = vmatpush1.msra.mxu0 %v293
    %405 = vmatprep.subr.mxu0 %v292
    %406 = vmatpush1.msra.mxu0 %v291
    %407 = vmatprep.subr.mxu0 0.0
    %408 = vmatpush2.msra.mxu0 0.0
    %409 = vmatprep.subr.mxu0 0.0
    %410 = vmatpush2.msra.mxu0 0.0
    %411 = vmatprep.subr.mxu0 0.0
    %412 = vmatpush2.msra.mxu0 0.0
    %413 = vmatprep.subr.mxu0 0.0
    %414 = vmatpush2.msra.mxu0 0.0
    %415 = vmatprep.subr.mxu0 0.0
    %416 = vmatpush2.msra.mxu0 0.0
    %417 = vmatprep.subr.mxu0 0.0
    %418 = vmatpush2.msra.mxu0 0.0
    %419 = vmatprep.subr.mxu0 0.0
    %420 = vmatpush2.msra.mxu0 0.0
    %421 = vmatprep.subr.mxu0 0.0
    %422 = vmatpush2.msra.mxu0 0.0
    %423 = vmatprep.subr.mxu0 0.0
    %424 = vmatpush2.msra.mxu0 0.0
    %425 = vmatprep.subr.mxu0 0.0
    %426 = vmatpush2.msra.mxu0 0.0
    %427 = vmatprep.subr.mxu0 0.0
    %428 = vmatpush2.msra.mxu0 0.0
    %429 = vmatprep.subr.mxu0 0.0
    %430 = vmatpush2.msra.mxu0 0.0
    %431 = vmatprep.subr.mxu0 0.0
    %432 = vmatpush2.msra.mxu0 0.0
    %433 = vmatprep.subr.mxu0 0.0
    %434 = vmatpush2.msra.mxu0 0.0
    %435 = vmatprep.subr.mxu0 0.0
    %436 = vmatpush2.msra.mxu0 0.0
    %437 = vmatprep.subr.mxu0 0.0
    %438 = vmatpush2.msra.mxu0 0.0
    %439 = vmatprep.mubr.f32.mxu0 0.0
    %440 = vmatmul.mubr.f32.gmra.mxu0 %v373
    %v441 = vpop.f32.mrf.mxu0
    %v442 = vadd.f32 0.0, %v441
    %v443 = vpop.f32.mrf.mxu0
    %v444 = vadd.f32 0.0, %v443
    %445 = vdwg.mxu0
    %v450 = vcombine.low %v368, %v370
    %v451 = vcombine.low %v442, %v444
    %454 = vst [vmem:[#allocation2] sm:$0xff] %v450
    %455 = vst [vmem:[#allocation2 + $0x8] sm:$0xff] %v451
    %v456 = vadd.f32 %v287, %v288
    %457 = vadd.xlane.f32.xlu0 %v456
    %v458 = vpop.xlane.xlu0 %457
    %v459 = vadd.f32 %v289, %v290
    %460 = vadd.xlane.f32.xlu0 %v459
    %v461 = vpop.xlane.xlu0 %460
    %v462 = vadd.f32 %v291, %v292
    %463 = vadd.xlane.f32.xlu0 %v462
    %v464 = vpop.xlane.xlu0 %463
    %v465 = vadd.f32 %v293, %v294
    %466 = vadd.xlane.f32.xlu0 %v465
    %v467 = vpop.xlane.xlu0 %466
    %v468 = vadd.f32 %v458, %v464
    %v469 = vadd.f32 %v461, %v467
    %v470 = vld [vmem:[%s5] sm:$0xff]
    %v471 = vld [vmem:[%s5 + $0x8] sm:$0xff]
    %v472 = vadd.f32 %v470, %v468
    %v473 = vadd.f32 %v471, %v469
    %vm474 = vcmask 7168
    %475 = vst.msk [vmem:[%s5] sm:$0xff] %vm474, %v472
    %476 = vst.msk [vmem:[%s5 + $0x8] sm:$0xff] %vm474, %v473
    // Predicated region
    $region22: #{tpu_custom_call.1} parent=1 // pred_check
      _
    $region23: #{tpu_custom_call.1} parent=1 // pred_check_branch
      %478 = sbr.rel (0) target = $region25
    $region24: #{tpu_custom_call.1} parent=1 // pred_region
      %s480 = ssub.s32 256, 256
      %481 = vsyncadd [#allocation3], %s480
      %s482 = sshll.u32 [#allocation2], 4
      %s483 = int_to_ptr.vmem [resolvable:$true] %s482
      %488 = dma.vmem_to_hbm [thread:$0]  %s483, 256, %s4, [#allocation3], 128, 128, 8
    $region25: #{tpu_custom_call.1} parent=1 // pred_fallthru
      _
    // Predicated region
    $region26: #{tpu_custom_call.1} parent=1 // pred_check
      _
    $region27: #{tpu_custom_call.1} parent=1 // pred_check_branch
      %490 = sbr.rel (0) target = $region29
    $region28: #{tpu_custom_call.1} parent=1 // pred_region
      _
    $region29: #{tpu_custom_call.1} parent=1 // pred_fallthru
      _
    // Predicated region
    $region30: #{tpu_custom_call.1} parent=1 // pred_check
      _
    $region31: #{tpu_custom_call.1} parent=1 // pred_check_branch
      %492 = sbr.rel (0) target = $region33
    $region32: #{tpu_custom_call.1} parent=1 // pred_region
      %493 = dma.done [#allocation3], 256
    $region33: #{tpu_custom_call.1} parent=1 // pred_fallthru
      _
    // Predicated region
    $region34: #{tpu_custom_call.1} parent=1 // pred_check
      _
    $region35: #{tpu_custom_call.1} parent=1 // pred_check_branch
      %495 = sbr.rel (0) target = $region37
    $region36: #{tpu_custom_call.1} parent=1 // pred_region
      _
    $region37: #{tpu_custom_call.1} parent=1 // pred_fallthru
      _
    %496 = vsyncpa [#allocation3], 1

</llo_original>
